<compile_context>
chip_gen: v7x
topology: tpu7x:2x2x1
jax: 0.10.0
libtpu: 0.0.40
codegen_flags: <defaults>
</compile_context>

<pallas_src>
import functools

import numpy as np
import jax
import jax.numpy as jnp
from jax.experimental import pallas as pl
from jax.experimental.pallas import tpu as pltpu

MASK_BIAS = -1e30          # additive attention mask value (bf16-representable)


# ----------------------------------------------------------------------------
# Generation-aware VMEM budgeting and tile selection
# ----------------------------------------------------------------------------
@functools.lru_cache(maxsize=None)
def _vmem_capacity_bytes():
    try:
        return int(pltpu.get_tpu_info().vmem_capacity_bytes)
    except Exception:                       # conservative fallback (v7x physical)
        return 64 << 20


def _vmem_budget(block_bytes):
    cap = _vmem_capacity_bytes() // 2       # ~32 MiB on v7x, ~64 MiB on v5e/v6e
    want = 2 * block_bytes + (12 << 20)     # double-buffered streams + headroom
    return int(min(max(want, 24 << 20), cap))


def _pick_row_tile(n, target, min_steps=2):
    """Row tile: multiple of 16 (bf16 sublane packing), as large as `target`,
    but split into >= min_steps grid steps where possible so the 'parallel'
    axis spans both v7x TensorCores."""
    if n <= 32:
        return n
    t = max((min(target, n) // 16) * 16, 16)
    while t > 16 and -(-n // t) < min_steps:
        t = max(((t // 2) // 16) * 16, 16)
    return t


def _pick_s_tile(s_pad, target):
    """Source tile: multiple of 128 that divides the (pre-padded) source extent."""
    if s_pad <= target:
        return s_pad
    t = (target // 128) * 128
    while t > 128 and s_pad % t != 0:
        t -= 128
    return max(t, 128)


# ----------------------------------------------------------------------------
# Kernel 1: per-ntype projection  feat = x @ W^T   (bf16 MXU, f32 accumulation)
# ----------------------------------------------------------------------------
def _project_kernel(x_ref, wT_ref, feat_ref):
    feat_ref[...] = jnp.dot(x_ref[...], wT_ref[...],
                            preferred_element_type=jnp.float32).astype(jnp.bfloat16)


def project(x, wT_bf16, num_heads, out_feats, tile_n=2048):
    """x: (N, in) float; wT_bf16: (in, H*F) bf16 (weight pre-transposed once)."""
    n, in_f = x.shape
    hf = num_heads * out_feats
    x_bf = x.astype(jnp.bfloat16)           # halve the dominant HBM input stream
    tn = _pick_row_tile(n, tile_n)
    grid = (pl.cdiv(n, tn),)
    block_bytes = tn * in_f * 2 + in_f * hf * 2 + tn * hf * (2 + 4)
    # TODO(synk): fuse the per-ntype projections into one pallas_call (stack the
    # zero-padded K across ntypes + scalar-prefetched weight index); K=24/32
    # underfills the 256-deep MXU contraction and each ntype pays launch cost.
    return pl.pallas_call(
        _project_kernel,
        grid=grid,
        in_specs=[pl.BlockSpec((tn, in_f), lambda i: (i, 0)),
                  pl.BlockSpec((in_f, hf), lambda i: (0, 0))],
        out_specs=pl.BlockSpec((tn, hf), lambda i: (i, 0)),
        out_shape=jax.ShapeDtypeStruct((n, hf), jnp.bfloat16),
        compiler_params=pltpu.CompilerParams(
            dimension_semantics=("parallel",),
            vmem_limit_bytes=_vmem_budget(block_bytes)),
    )(x_bf, wT_bf16)


# ----------------------------------------------------------------------------
# Kernel 2 (per destination node type):
#   grid = (dst row tiles  [parallel], source tiles  [arbitrary])
#   z   = leaky_relu(er_dst + (el_src + ee)) + bias          per head  (TD, TS)
#   online softmax over S blocks with VMEM scratch (m, l, acc)
#   rst = acc / l  written lane-dense (TD, H*F) on the last S block
#   m, l returned so per-edge attention (res_attn) is reconstructed in glue.
# ----------------------------------------------------------------------------
def _attn_agg_kernel(er_ref, elee_ref, bias_ref, feat_ref,
                     rst_ref, m_ref, l_ref,
                     m_sc, l_sc, acc_sc,
                     *, num_heads, out_feats, negative_slope):
    j = pl.program_id(1)

    @pl.when(j == 0)
    def _():
        m_sc[...] = jnp.full_like(m_sc, MASK_BIAS)
        l_sc[...] = jnp.zeros_like(l_sc)
        acc_sc[...] = jnp.zeros_like(acc_sc)

    er = er_ref[...]                                   # (TD, H)   f32
    elee = elee_ref[...]                               # (H, TS)   f32 (el_src + ee)
    bias = bias_ref[...].astype(jnp.float32)           # (TD, TS)  0 / -1e30
    feat = feat_ref[...]                               # (TS, H*F) bf16

    # TODO(synk): on v6e/v7x the leaky-relu/exp path could run in bf16 (and the
    # p/feat aggregation matmul in fp8 on v7x) for ~2x VPU/EUP throughput; kept
    # f32 here for all-generation numerical parity with the reference.
    for h in range(num_heads):                         # H small & static -> unrolled
        z = er[:, h:h + 1] + elee[h:h + 1, :]                      # (TD, TS)
        z = jnp.where(z >= 0.0, z, negative_slope * z)             # LeakyReLU
        z = z + bias                                               # mask, no selects
        m_prev = m_sc[h]                                           # (TD, 1)
        m_new = jnp.maximum(m_prev, jnp.max(z, axis=-1, keepdims=True))
        alpha = jnp.exp(m_prev - m_new)                            # (TD, 1)
        p = jnp.exp(z - m_new)                                     # masked cols -> 0
        l_sc[h] = alpha * l_sc[h] + jnp.sum(p, axis=-1, keepdims=True)
        f_h = feat[:, h * out_feats:(h + 1) * out_feats]           # (TS, F) bf16
        acc_sc[h] = alpha * acc_sc[h] + jnp.dot(
            p.astype(jnp.bfloat16), f_h, preferred_element_type=jnp.float32)
        m_sc[h] = m_new

    @pl.when(j == pl.num_programs(1) - 1)
    def _():
        outs = []
        for h in range(num_heads):
            l_h = jnp.maximum(l_sc[h], jnp.float32(1e-20))         # (TD, 1)
            outs.append(acc_sc[h] / l_h)                           # exact division
        rst_ref[...] = jnp.concatenate(outs, axis=-1)              # (TD, H*F) dense
        m_ref[...] = jnp.concatenate([m_sc[h] for h in range(num_heads)], axis=-1)
        l_ref[...] = jnp.concatenate([l_sc[h] for h in range(num_heads)], axis=-1)


def attention_aggregate(er_dst, elee, bias, feat_src, num_heads, out_feats,
                        negative_slope=0.2, tile_d=256, tile_s=1024):
    """er_dst: (D, H) f32 | elee: (H, S_pad) f32 | bias: (D, S_pad) bf16 additive
    mask | feat_src: (S_pad, H*F) bf16, lane-dense."""
    d_n, s_pad = bias.shape
    hf = num_heads * out_feats
    td = _pick_row_tile(d_n, tile_d)
    ts = _pick_s_tile(s_pad, tile_s)
    grid = (pl.cdiv(d_n, td), s_pad // ts)
    kernel = functools.partial(_attn_agg_kernel, num_heads=num_heads,
                               out_feats=out_feats, negative_slope=negative_slope)
    block_bytes = (td * num_heads * 4 + num_heads * ts * 4 + td * ts * 2
                   + ts * hf * 2 + td * hf * 4 + 2 * td * num_heads * 4
                   + 3 * num_heads * td * 128 * 4      # m/l/acc scratch (lane pad)
                   + 3 * td * ts * 4)                  # z / p temporaries
    rst, m, l = pl.pallas_call(
        kernel,
        grid=grid,
        in_specs=[pl.BlockSpec((td, num_heads), lambda i, j: (i, 0)),
                  pl.BlockSpec((num_heads, ts), lambda i, j: (0, j)),
                  pl.BlockSpec((td, ts), lambda i, j: (i, j)),
                  pl.BlockSpec((ts, hf), lambda i, j: (j, 0))],
        out_specs=(pl.BlockSpec((td, hf), lambda i, j: (i, 0)),
                   pl.BlockSpec((td, num_heads), lambda i, j: (i, 0)),
                   pl.BlockSpec((td, num_heads), lambda i, j: (i, 0))),
        out_shape=(jax.ShapeDtypeStruct((d_n, hf), jnp.float32),
                   jax.ShapeDtypeStruct((d_n, num_heads), jnp.float32),
                   jax.ShapeDtypeStruct((d_n, num_heads), jnp.float32)),
        scratch_shapes=[pltpu.VMEM((num_heads, td, 1), jnp.float32),
                        pltpu.VMEM((num_heads, td, 1), jnp.float32),
                        pltpu.VMEM((num_heads, td, out_feats), jnp.float32)],
        compiler_params=pltpu.CompilerParams(
            dimension_semantics=("parallel", "arbitrary"),
            vmem_limit_bytes=_vmem_budget(block_bytes)),
    )(er_dst, elee, bias, feat_src)
    return rst, m, l


# ----------------------------------------------------------------------------
# One-time preprocessing (graph structure and parameters, not per forward)
# ----------------------------------------------------------------------------
def preprocess_graph(graph, s_align=128):
    """Concatenate per-dst-type adjacency once and turn it into a bf16 additive
    mask bias (0 where edge, -1e30 where not), padded in S to a lane multiple."""
    meta = {}
    for dsttype in graph["ntypes"]:
        incoming = [(src, e) for (src, e, d) in graph["canonical_etypes"] if d == dsttype]
        if not incoming:
            meta[dsttype] = None
            continue
        adjs = [np.asarray(graph["adj"][e], np.float32) for _, e in incoming]
        adj_cat = adjs[0] if len(adjs) == 1 else np.concatenate(adjs, axis=1)
        d_n, s_n = adj_cat.shape
        s_pad = ((s_n + s_align - 1) // s_align) * s_align
        bias = np.full((d_n, s_pad), MASK_BIAS, np.float32)
        bias[:, :s_n] = np.where(adj_cat > 0, 0.0, MASK_BIAS)
        meta[dsttype] = dict(incoming=incoming, s_n=s_n, s_pad=s_pad,
                             bias=jnp.asarray(bias, dtype=jnp.bfloat16))
    return meta


def prepare_params(params, num_heads, out_feats, edge_feats, canonical_etypes):
    """Hoist all parameter preprocessing out of the per-forward path."""
    H, F, EF = num_heads, out_feats, edge_feats
    prep = {
        "wT": {nt: jnp.transpose(w).astype(jnp.bfloat16)
               for nt, w in params["fc"].items()},                # (in, H*F) bf16
        "attn_l": params["attn_l"].reshape(H, F),
        "attn_r": params["attn_r"].reshape(H, F),
    }
    ee = {}
    for k, (_, ename, _) in enumerate(canonical_etypes):
        e_proj = jnp.dot(params["edge_emb"][k][None, :], params["fc_e"].T,
                         precision=jax.lax.Precision.HIGHEST).reshape(H, EF)
        ee[ename] = jnp.sum(e_proj * params["attn_e"][0], axis=-1)  # (H,)
    prep["ee"] = ee
    return prep


# ----------------------------------------------------------------------------
# Full forward (JAX glue around the two Pallas kernels)
# ----------------------------------------------------------------------------
def hetero_gat_forward(prep, graph, graph_meta, nfeat, num_heads, out_feats,
                       negative_slope=0.2, tile_n=2048, tile_d=256, tile_s=1024):
    H, F = num_heads, out_feats
    feat, el, er = {}, {}, {}
    for ntype, x in nfeat.items():
        f_bf = project(x, prep["wT"][ntype], H, F, tile_n=tile_n)   # (N, H*F) bf16
        feat[ntype] = f_bf
        f32 = f_bf.astype(jnp.float32).reshape(-1, H, F)
        el[ntype] = jnp.einsum("nhf,hf->nh", f32, prep["attn_l"])   # (N, H) f32
        er[ntype] = jnp.einsum("nhf,hf->nh", f32, prep["attn_r"])   # (N, H) f32
    ee = prep["ee"]

    rst, res_attn = {}, {}
    for dsttype, d_n in graph["ntypes"].items():
        meta = graph_meta[dsttype]
        if meta is None:
            # DGL semantics: ntypes that are never a destination keep projected 'ft'.
            rst[dsttype] = feat[dsttype].astype(jnp.float32).reshape(d_n, H, F)
            continue
        incoming, s_n, s_pad = meta["incoming"], meta["s_n"], meta["s_pad"]
        elee_blocks = [el[src].T + ee[e][:, None] for src, e in incoming]   # (H, N_src)
        elee = elee_blocks[0] if len(elee_blocks) == 1 else jnp.concatenate(elee_blocks, 1)
        feats_in = [feat[src] for src, _ in incoming]
        feat_cat = feats_in[0] if len(feats_in) == 1 else jnp.concatenate(feats_in, 0)
        if s_pad > s_n:
            elee = jnp.pad(elee, ((0, 0), (0, s_pad - s_n)))
            feat_cat = jnp.pad(feat_cat, ((0, s_pad - s_n), (0, 0)))

        rst_flat, m_rows, l_rows = attention_aggregate(
            er[dsttype], elee, meta["bias"], feat_cat, H, F,
            negative_slope=negative_slope, tile_d=tile_d, tile_s=tile_s)
        rst[dsttype] = rst_flat.reshape(d_n, H, F)

        # per-edge attention (res_attn) reconstructed from row softmax stats;
        # no dense (H, D, S) attention matrix is ever written to HBM.
        for src, e in incoming:
            s_idx, d_idx = graph["edges"][e]
            z = el[src][s_idx] + er[dsttype][d_idx] + ee[e][None, :]       # (E, H)
            z = jnp.where(z >= 0.0, z, negative_slope * z)
            a = jnp.exp(z - m_rows[d_idx]) / jnp.maximum(l_rows[d_idx], 1e-20)
            res_attn[e] = a[:, :, None]                                    # (E, H, 1)
    # TODO(synk): feat_drop/attn_drop (p=0 -> identity), residual/bias/activation
    # (disabled by module defaults) and edge_weight=None are not materialized.
    return rst, res_attn


# ----------------------------------------------------------------------------
# Pure-numpy edge-list reference (DGL semantics); big matmuls emulate the
# kernel's bf16-input / f32-accumulate rounding so the comparison stays tight.
# ----------------------------------------------------------------------------
def _bf16(x):
    return np.asarray(jnp.asarray(np.asarray(x, np.float32),
                                  jnp.bfloat16).astype(jnp.float32))


def reference_forward(p, graph, nfeat, H, F, EF, slope=0.2):
    feats, els, ers = {}, {}, {}
    al = np.asarray(p["attn_l"], np.float32).reshape(H, F)
    ar = np.asarray(p["attn_r"], np.float32).reshape(H, F)
    for ntype, x in nfeat.items():
        w = _bf16(p["fc"][ntype])
        feat = _bf16(_bf16(x) @ w.T).reshape(x.shape[0], H, F)
        feats[ntype] = feat
        els[ntype] = (feat * al[None]).sum(-1)
        ers[ntype] = (feat * ar[None]).sum(-1)
    edge_logits = {}
    for k, (src, ename, dst) in enumerate(graph["canonical_etypes"]):
        e_proj = (p["edge_emb"][k][None, :] @ p["fc_e"].T).reshape(H, EF)
        ee = (e_proj * p["attn_e"][0]).sum(-1)
        s_idx, d_idx = graph["edges"][ename]
        logit = els[src][s_idx] + ers[dst][d_idx] + ee[None, :]
        edge_logits[ename] = np.where(logit >= 0, logit, slope * logit)
    rst, res_attn = {}, {}
    for dsttype, D in graph["ntypes"].items():
        incoming = [(src, ename) for (src, ename, d) in graph["canonical_etypes"]
                    if d == dsttype]
        if not incoming:
            rst[dsttype] = feats[dsttype]
            continue
        all_logit = np.concatenate([edge_logits[e] for _, e in incoming], axis=0)
        all_dst = np.concatenate([graph["edges"][e][1] for _, e in incoming], axis=0)
        all_src_feat = np.concatenate(
            [feats[src][graph["edges"][e][0]] for src, e in incoming], axis=0)
        maxes = np.full((D, H), -np.inf, np.float32)
        np.maximum.at(maxes, all_dst, all_logit)
        expv = np.exp(all_logit - maxes[all_dst])
        denom = np.zeros((D, H), np.float32)
        np.add.at(denom, all_dst, expv)
        a = expv / denom[all_dst]
        out = np.zeros((D, H, F), np.float32)
        np.add.at(out, all_dst, all_src_feat * a[:, :, None])
        rst[dsttype] = out
        off = 0
        for src, ename in incoming:
            e_k = len(graph["edges"][ename][0])
            res_attn[ename] = a[off:off + e_k][:, :, None]
            off += e_k
    return rst, res_attn


def xavier_normal(key, shape, gain):
    rf = int(np.prod(shape[2:])) if len(shape) > 2 else 1
    fan_in = shape[1] * rf
    fan_out = shape[0] * rf
    std = gain * np.sqrt(2.0 / (fan_in + fan_out))
    return std * jax.random.normal(key, shape, dtype=jnp.float32)


if __name__ == "__main__":
    H, F, EF = 4, 32, 16                        # num_heads, out_feats, edge_feats
    ntype_sizes = {"A": 192, "B": 160}
    in_feats = {"A": 32, "B": 24}
    canonical = [("A", "aa", "A"), ("A", "ab", "B"), ("B", "ba", "A")]
    num_etypes = len(canonical)

    key = jax.random.PRNGKey(0)
    keys = jax.random.split(key, 16)
    gain = float(np.sqrt(2.0))                  # nn.init.calculate_gain('relu')

    params = {
        "edge_emb": jax.random.normal(keys[0], (num_etypes, EF), jnp.float32),
        "fc": {"A": xavier_normal(keys[1], (H * F, in_feats["A"]), gain),
               "B": xavier_normal(keys[2], (H * F, in_feats["B"]), gain)},
        "fc_e": xavier_normal(keys[3], (EF * H, EF), gain),
        "attn_l": xavier_normal(keys[4], (1, H, F), gain),
        "attn_r": xavier_normal(keys[5], (1, H, F), gain),
        "attn_e": xavier_normal(keys[6], (1, H, EF), gain),
    }

    # synthetic heterograph (dense 0/1 adjacency + matching edge lists)
    adj, edges = {}, {}
    for i, (src, ename, dst) in enumerate(canonical):
        a = np.array(jax.random.bernoulli(
            keys[7 + i], 0.2, (ntype_sizes[dst], ntype_sizes[src]))).astype(np.float32)
        a[:, 0] = 1.0                           # >=1 incoming edge per dst node
        d_idx, s_idx = np.nonzero(a)
        adj[ename] = a
        edges[ename] = (s_idx, d_idx)
    graph = {"ntypes": ntype_sizes, "canonical_etypes": canonical,
             "adj": adj, "edges": edges}

    graph_meta = preprocess_graph(graph)        # structure: built once, reused
    prep = prepare_params(params, H, F, EF, canonical)   # params: prepped once

    nfeat = {"A": jax.random.normal(keys[12], (ntype_sizes["A"], in_feats["A"]), jnp.float32),
             "B": jax.random.normal(keys[13], (ntype_sizes["B"], in_feats["B"]), jnp.float32)}

    # Small tiles here only to exercise the multi-step "parallel" D grid and the
    # S-blocked online-softmax path at demo scale (production defaults 256/1024).
    rst, res_attn = hetero_gat_forward(prep, graph, graph_meta, nfeat, H, F,
                                       tile_d=64, tile_s=128)
    jax.block_until_ready(rst)
    jax.block_until_ready(res_attn)

    # validate against a pure-numpy edge-list (DGL-semantics) reference
    params_np = jax.tree_util.tree_map(np.asarray, params)
    nfeat_np = {k: np.asarray(v) for k, v in nfeat.items()}
    rst_ref, attn_ref = reference_forward(params_np, graph, nfeat_np, H, F, EF)
    for nt in rst:
        np.testing.assert_allclose(np.asarray(rst[nt], dtype=np.float32), rst_ref[nt],
                                   rtol=1e-2, atol=1e-2)
    for e in res_attn:
        np.testing.assert_allclose(np.asarray(res_attn[e], dtype=np.float32), attn_ref[e],
                                   rtol=1e-2, atol=1e-2)

    print("KERNEL_OK")
</pallas_src>

<mosaic_0001>
module attributes {stable_mosaic.version = 11 : i64} {
  func.func @_project_kernel(%arg0: i32, %arg1: memref<96x32xbf16, #tpu.memory_space<vmem>>, %arg2: memref<32x128xbf16, #tpu.memory_space<vmem>>, %arg3: memref<96x128xbf16, #tpu.memory_space<vmem>>) attributes {dimension_semantics = [#tpu.dimension_semantics<parallel>], iteration_bounds = array<i64: 2>, scalar_prefetch = 0 : i64, scratch_operands = 0 : i64, tpu.core_type = #tpu.core_type<tc>, window_params = [{transform_indices = @transform_0, window_bounds = array<i64: 96, 32>}, {pipeline_mode = #tpu.pipeline_mode<synchronous>, transform_indices = @transform_1, window_bounds = array<i64: 32, 128>}, {transform_indices = @transform_2, window_bounds = array<i64: 96, 128>}]} {
    %c0 = arith.constant 0 : index
    %c0_0 = arith.constant 0 : index
    %0 = vector.load %arg1[%c0, %c0_0] : memref<96x32xbf16, #tpu.memory_space<vmem>>, vector<96x32xbf16>
    %c0_1 = arith.constant 0 : index
    %c0_2 = arith.constant 0 : index
    %1 = vector.load %arg2[%c0_1, %c0_2] : memref<32x128xbf16, #tpu.memory_space<vmem>>, vector<32x128xbf16>
    %cst = arith.constant dense<0.000000e+00> : vector<96x128xf32>
    %2 = tpu.matmul %0, %1, %cst {dimension_numbers = #tpu.dot_dimension_numbers<[1], [0], [0], [1], [0, 0, 1, 1], [], []>} : vector<96x32xbf16>, vector<32x128xbf16>, vector<96x128xf32> -> vector<96x128xf32>
    %3 = arith.truncf %2 : vector<96x128xf32> to vector<96x128xbf16>
    %c0_3 = arith.constant 0 : index
    %c0_4 = arith.constant 0 : index
    %4 = vector.load %arg3[%c0_3, %c0_4] : memref<96x128xbf16, #tpu.memory_space<vmem>>, vector<96x128xbf16>
    tpu.vector_store %arg3[%c0_3, %c0_4], %3 {strides = array<i32>} : memref<96x128xbf16, #tpu.memory_space<vmem>>, vector<96x128xbf16>,
    return
  }
  func.func @transform_0(%arg0: i32) -> (i32, i32) {
    %c0_i32 = arith.constant 0 : i32
    %c0_i32_0 = arith.constant 0 : i32
    return %arg0, %c0_i32 : i32, i32
  }
  func.func @transform_1(%arg0: i32) -> (i32, i32) {
    %c0_i32 = arith.constant 0 : i32
    %c0_i32_0 = arith.constant 0 : i32
    %c0_i32_1 = arith.constant 0 : i32
    return %c0_i32, %c0_i32_0 : i32, i32
  }
  func.func @transform_2(%arg0: i32) -> (i32, i32) {
    %c0_i32 = arith.constant 0 : i32
    %c0_i32_0 = arith.constant 0 : i32
    return %arg0, %c0_i32 : i32, i32
  }
}

</mosaic_0001>

<llo_original>
// kernel: tpu_custom_call.1
$region0: #{tpu_custom_call.1}
  #allocation0 [shape = 'u32[]', space=smem, size = 0x4, offset = 0x4, fixed_abs, tag = 'smem constant byte address 0x4 - core index']
  #allocation1 [shape = 'u32[144,128]{1,0:T(1,128)}', space=vmem, size = 0x12000, scoped, tag = 'internal scratch']
  %s0 = inlined_call_operand.vmem [shape: bf16[192,32], index: 0, kind: input, shape index: {}]
  %s1 = inlined_call_operand.vmem [shape: bf16[32,128], index: 1, kind: input, shape index: {}]
  %s2 = inlined_call_operand.hbm [shape: bf16[192,128], index: 2, kind: output, shape index: {}]
  %s3 = sld [smem:[#allocation0]]
  $region41: #{tpu_custom_call.1} parent=0
    _
  %s5 = ssub.s32 1, %s3
  %s6 = scalar_select 0, %s5, %s3
  $region1: #{tpu_custom_call.1} parent=0
    #allocation2 [shape = 'u8[49152]{0}', space=vmem, size = 0xc000, scoped, tag = 'output window, operand 0']
    #allocation3 [shape = 's32[2]{0}', space=sflag, size = 0x8, scoped, tag = 'scoped memory for tpu_custom_call.1']
    %7 = vsyncpa [#allocation3], 0
    %s8 = scalar_lea.sflag [#allocation3], 1
    %9 = vsyncpa %s8, 0
    loop: start=0, step=1, limit=4
    $region2: #{tpu_custom_call.1} parent=1 // loop_pre_header
      _
    $region3: #{tpu_custom_call.1} parent=1 // loop_header
      %s11 = sphi 0, %s15
      %p12 = scmp.ge.s32.totalorder %s11, 4
      %s21 = sphi 0, %s23
      %s24 = sphi 0, %s21
      %s25 = sphi 0, %s24
      %s41 = sphi 0, %s25
      %s45 = sphi 0, %s45
      %s47 = sphi 0, %s45
      %s48 = sphi 0, %s47
      %s62 = sphi 0, %s48
      %s68 = sphi 0, %s70
      %s71 = sphi 0, %s68
      %s72 = sphi 0, %s71
      %s88 = sphi 0, %s72
    $region4: #{tpu_custom_call.1} parent=1 // loop_header_branch
      %14 = sbr.rel (%p12) target = $region8
    $region5: #{tpu_custom_call.1} parent=1 // loop_body
      %s16 = ssub.s32 %s11, 1
      %s17 = ssub.s32 %s11, 2
      %s18 = sadd.s32 %s11, 1
      %s19 = ssub.s32 %s11, %s18
      %p20 = scmp.eq.s32.totalorder %s19, 0
      %s22 = sadd.s32 %s21, 1
      %s23 = scalar_select %p20, %s21, %s22
      %p26 = pneg %p20
      %p27 = scmp.eq.s32.totalorder %s11, 1
      %p28 = por %p26, %p27
      %p29 = scmp.ne.s32.totalorder %s21, %s24
      %p30 = scmp.eq.s32.totalorder %s11, 0
      %p31 = por %p29, %p30
      %p32 = scmp.ne.s32.totalorder %s21, %s24
      %p33 = scmp.eq.s32.totalorder %s16, 1
      %p34 = por %p32, %p33
      %p35 = scmp.ne.s32.totalorder %s24, %s25
      %p36 = scmp.eq.s32.totalorder %s16, 0
      %p37 = por %p35, %p36
      %p38 = scmp.ne.s32.totalorder %s24, %s25
      %p39 = scmp.eq.s32.totalorder %s17, 1
      %p40 = por %p38, %p39
      %p42 = scmp.ne.s32.totalorder %s25, %s41
      %p43 = scmp.eq.s32.totalorder %s17, 0
      %p44 = por %p42, %p43
      %s46 = sadd.s32 %s45, 1
      %p49 = scmp.eq.s32.totalorder %s11, 1
      %p50 = scmp.ne.s32.totalorder %s45, %s47
      %p51 = scmp.eq.s32.totalorder %s11, 0
      %p52 = por %p50, %p51
      %p53 = scmp.ne.s32.totalorder %s45, %s47
      %p54 = scmp.eq.s32.totalorder %s16, 1
      %p55 = por %p53, %p54
      %p56 = scmp.ne.s32.totalorder %s47, %s48
      %p57 = scmp.eq.s32.totalorder %s16, 0
      %p58 = por %p56, %p57
      %p59 = scmp.ne.s32.totalorder %s47, %s48
      %p60 = scmp.eq.s32.totalorder %s17, 1
      %p61 = por %p59, %p60
      %p63 = scmp.ne.s32.totalorder %s48, %s62
      %p64 = scmp.eq.s32.totalorder %s17, 0
      %p65 = por %p63, %p64
      %s66 = ssub.s32 %s11, %s18
      %p67 = scmp.eq.s32.totalorder %s66, 0
      %s69 = sadd.s32 %s68, 1
      %s70 = scalar_select %p67, %s68, %s69
      %p73 = pneg %p67
      %p74 = scmp.eq.s32.totalorder %s11, 1
      %p75 = por %p73, %p74
      %p76 = scmp.ne.s32.totalorder %s68, %s71
      %p77 = scmp.eq.s32.totalorder %s11, 0
      %p78 = por %p76, %p77
      %p79 = scmp.ne.s32.totalorder %s68, %s71
      %p80 = scmp.eq.s32.totalorder %s16, 1
      %p81 = por %p79, %p80
      %p82 = scmp.ne.s32.totalorder %s71, %s72
      %p83 = scmp.eq.s32.totalorder %s16, 0
      %p84 = por %p82, %p83
      %p85 = scmp.ne.s32.totalorder %s71, %s72
      %p86 = scmp.eq.s32.totalorder %s17, 1
      %p87 = por %p85, %p86
      %p89 = scmp.ne.s32.totalorder %s72, %s88
      %p90 = scmp.eq.s32.totalorder %s17, 0
      %p91 = por %p89, %p90
      %p92 = scmp.le.s32.totalorder 1, %s11
      %p93 = scmp.lt.s32.totalorder %s11, 3
      %p94 = pnand %p92, %p93
      %p95 = pneg %p94
      // Predicated region
      $region9: #{tpu_custom_call.1} parent=5 // pred_check
        _
      $region10: #{tpu_custom_call.1} parent=5 // pred_check_branch
        %97 = sbr.rel (%p94) target = $region12
      $region11: #{tpu_custom_call.1} parent=5 // pred_region
        %s98 = ssub.s32 %s11, 1
        // Predicated region
        $region13: #{tpu_custom_call.1} parent=11 // pred_check
          %p99 = pneg %p58
        $region14: #{tpu_custom_call.1} parent=11 // pred_check_branch
          %101 = sbr.rel (%p99) target = $region16
        $region15: #{tpu_custom_call.1} parent=11 // pred_region
          _
        $region16: #{tpu_custom_call.1} parent=11 // pred_fallthru
          _
      $region12: #{tpu_custom_call.1} parent=5 // pred_fallthru
        _
      %p102 = scmp.lt.s32.totalorder %s11, 2
      // Predicated region
      $region17: #{tpu_custom_call.1} parent=5 // pred_check
        %p103 = pneg %p102
      $region18: #{tpu_custom_call.1} parent=5 // pred_check_branch
        %105 = sbr.rel (%p103) target = $region20
      $region19: #{tpu_custom_call.1} parent=5 // pred_region
        // Predicated region
        $region21: #{tpu_custom_call.1} parent=19 // pred_check
          %p106 = pneg %p31
        $region22: #{tpu_custom_call.1} parent=19 // pred_check_branch
          %108 = sbr.rel (%p106) target = $region24
        $region23: #{tpu_custom_call.1} parent=19 // pred_region
          %s109 = smul.u32 12, %s11
          %p110 = scmp.lt.s32.totalorder %s109, 23
          %s111 = scalar_select %p110, %s109, 23
          %s112 = smul.addr %s111, 4
          %s113 = scalar_lea.vmem %s0, %s112
          %s114 = smul.u32 12, %s11
        $region24: #{tpu_custom_call.1} parent=19 // pred_fallthru
          _
      $region20: #{tpu_custom_call.1} parent=5 // pred_fallthru
        _
      %p115 = scmp.le.s32.totalorder 1, %s11
      %p116 = scmp.lt.s32.totalorder %s11, 3
      %p117 = pnand %p115, %p116
      %p118 = pneg %p117
      // Predicated region
      $region25: #{tpu_custom_call.1} parent=5 // pred_check
        _
      $region26: #{tpu_custom_call.1} parent=5 // pred_check_branch
        %120 = sbr.rel (%p117) target = $region28
      $region27: #{tpu_custom_call.1} parent=5 // pred_region
        %s121 = ssub.s32 %s11, 1
        %s122 = smul.u32 12, %s16
        %p123 = scmp.lt.s32.totalorder %s122, 23
        %s124 = scalar_select %p123, %s122, 23
        %s125 = smul.addr %s124, 4
        %s126 = scalar_lea.vmem %s0, %s125
        %p127 = pneg %p37
        %p128 = pneg %p34
        %p129 = pneg %p58
        %p130 = pneg %p55
        %p131 = pneg %p84
        %p132 = pneg %p81
        %s133 = sand.u32 %s71, 1
        %s134 = scalar_lea.sflag [#allocation3], %s133
        %s135 = sand.u32 %s71, 1
        %s136 = smul.addr %s135, 48
        %s137 = scalar_lea.vmem [#allocation2], %s136
        %s138 = smul.u32 12, %s16
        %p139 = scmp.lt.s32.totalorder %s138, 23
        %s140 = scalar_select %p139, %s138, 23
        %s141 = smul.addr %s140, 4
        %s142 = scalar_lea.vmem %s0, %s141
        %s143 = smul.u32 12, %s16
        %s144 = smul.u32 12, %s16
        %v146 = vld [vmem:[%s142] sm:$0xf]
        %v147 = vld [vmem:[%s142 + $0x4] sm:$0xf]
        %v148 = vld [vmem:[%s142 + $0x8] sm:$0xf]
        %v149 = vld [vmem:[%s142 + $0xc] sm:$0xf]
        %v150 = vld [vmem:[%s142 + $0x10] sm:$0xf]
        %v151 = vld [vmem:[%s142 + $0x14] sm:$0xf]
        %v152 = vld [vmem:[%s142 + $0x18] sm:$0xf]
        %v153 = vld [vmem:[%s142 + $0x1c] sm:$0xf]
        %v154 = vld [vmem:[%s142 + $0x20] sm:$0xf]
        %v155 = vld [vmem:[%s142 + $0x24] sm:$0xf]
        %v156 = vld [vmem:[%s142 + $0x28] sm:$0xf]
        %v157 = vld [vmem:[%s142 + $0x2c] sm:$0xf]
        %v158 = vld [vmem:[%s1] sm:$0xf]
        %v159 = vld [vmem:[%s1 + $0x4] sm:$0xf]
        %v160 = vld [vmem:[%s1 + $0x8] sm:$0xf]
        %v161 = vld [vmem:[%s1 + $0xc] sm:$0xf]
        %v174 = vunpack.c.l.b16 %v146
        %v175 = vunpack.c.l.b16 %v147
        %v176 = vunpack.c.l.b16 %v148
        %v177 = vunpack.c.l.b16 %v149
        %v178 = vunpack.c.l.b16 %v150
        %v179 = vunpack.c.l.b16 %v151
        %v180 = vunpack.c.l.b16 %v152
        %v181 = vunpack.c.l.b16 %v153
        %v182 = vunpack.c.l.b16 %v154
        %v183 = vunpack.c.l.b16 %v155
        %v184 = vunpack.c.l.b16 %v156
        %v185 = vunpack.c.l.b16 %v157
        %v186 = vpack.c.b16 %v175, %v174
        %v187 = vpack.c.b16 %v177, %v176
        %v188 = vpack.c.b16 %v179, %v178
        %v189 = vpack.c.b16 %v181, %v180
        %v190 = vpack.c.b16 %v183, %v182
        %v191 = vpack.c.b16 %v185, %v184
        %v196 = vunpack.c.l.b16 %v158
        %v197 = vunpack.c.l.b16 %v159
        %v198 = vunpack.c.l.b16 %v160
        %v199 = vunpack.c.l.b16 %v161
        %v200 = vpack.c.b16 %v197, %v196
        %v201 = vpack.c.b16 %v199, %v198
        %vm204 = vcmask 261120
        %v206 = vsel %vm204, %v186, 0
        %v209 = vsel %vm204, %v187, 0
        %v212 = vsel %vm204, %v188, 0
        %v215 = vsel %vm204, %v189, 0
        %v218 = vsel %vm204, %v190, 0
        %v221 = vsel %vm204, %v191, 0
        %223 = vmatprep.subr.bf16.mxu0 0
        %224 = vmatpush1.bf16.msra.mxu0 %v200
        %225 = vmatprep.subr.bf16.mxu0 0
        %226 = vmatpush1.bf16.msra.mxu0 %v201
        %227 = vmatprep.subr.bf16.mxu0 0
        %228 = vmatpush1.bf16.msra.mxu0 0
        %229 = vmatprep.subr.bf16.mxu0 0
        %230 = vmatpush1.bf16.msra.mxu0 0
        %231 = vmatprep.subr.bf16.mxu0 0
        %232 = vmatpush1.bf16.msra.mxu0 0
        %233 = vmatprep.subr.bf16.mxu0 0
        %234 = vmatpush1.bf16.msra.mxu0 0
        %235 = vmatprep.subr.bf16.mxu0 0
        %236 = vmatpush1.bf16.msra.mxu0 0
        %237 = vmatprep.subr.bf16.mxu0 0
        %238 = vmatpush1.bf16.msra.mxu0 0
        %239 = vmatprep.subr.bf16.mxu0 0
        %240 = vmatpush1.bf16.msra.mxu0 0
        %241 = vmatprep.subr.bf16.mxu0 0
        %242 = vmatpush1.bf16.msra.mxu0 0
        %243 = vmatprep.subr.bf16.mxu0 0
        %244 = vmatpush1.bf16.msra.mxu0 0
        %245 = vmatprep.subr.bf16.mxu0 0
        %246 = vmatpush1.bf16.msra.mxu0 0
        %247 = vmatprep.subr.bf16.mxu0 0
        %248 = vmatpush1.bf16.msra.mxu0 0
        %249 = vmatprep.subr.bf16.mxu0 0
        %250 = vmatpush1.bf16.msra.mxu0 0
        %251 = vmatprep.subr.bf16.mxu0 0
        %252 = vmatpush1.bf16.msra.mxu0 0
        %253 = vmatprep.subr.bf16.mxu0 0
        %254 = vmatpush1.bf16.msra.mxu0 0
        %255 = vmatprep.mubr.bf16.mxu0 0
        %256 = vmatmul.mubr.bf16.gmra.mrb[0].mxu0 %v206
        %v257 = vpop.f32.mrb[0].mxu0
        %v258 = vadd.f32 0.0, %v257
        %v259 = vpop.f32.mrb[0].mxu0
        %v260 = vpop.f32.mrb[0].mxu0
        %v261 = vadd.f32 0.0, %v260
        %v262 = vpop.f32.mrb[0].mxu0
        %263 = vmatprep.mubr.bf16.mxu0 0
        %264 = vmatmul.mubr.bf16.gmra.mrb[0].mxu0 %v209
        %v265 = vpop.f32.mrb[0].mxu0
        %v266 = vadd.f32 0.0, %v265
        %v267 = vpop.f32.mrb[0].mxu0
        %v268 = vpop.f32.mrb[0].mxu0
        %v269 = vadd.f32 0.0, %v268
        %v270 = vpop.f32.mrb[0].mxu0
        %271 = vmatprep.mubr.bf16.mxu0 0
        %272 = vmatmul.mubr.bf16.gmra.mrb[0].mxu0 %v212
        %v273 = vpop.f32.mrb[0].mxu0
        %v274 = vadd.f32 0.0, %v273
        %v275 = vpop.f32.mrb[0].mxu0
        %v276 = vpop.f32.mrb[0].mxu0
        %v277 = vadd.f32 0.0, %v276
        %v278 = vpop.f32.mrb[0].mxu0
        %279 = vmatprep.mubr.bf16.mxu0 0
        %280 = vmatmul.mubr.bf16.gmra.mrb[0].mxu0 %v215
        %v281 = vpop.f32.mrb[0].mxu0
        %v282 = vadd.f32 0.0, %v281
        %v283 = vpop.f32.mrb[0].mxu0
        %v284 = vpop.f32.mrb[0].mxu0
        %v285 = vadd.f32 0.0, %v284
        %v286 = vpop.f32.mrb[0].mxu0
        %287 = vmatprep.mubr.bf16.mxu0 0
        %288 = vmatmul.mubr.bf16.gmra.mrb[0].mxu0 %v218
        %v289 = vpop.f32.mrb[0].mxu0
        %v290 = vadd.f32 0.0, %v289
        %v291 = vpop.f32.mrb[0].mxu0
        %v292 = vpop.f32.mrb[0].mxu0
        %v293 = vadd.f32 0.0, %v292
        %v294 = vpop.f32.mrb[0].mxu0
        %295 = vmatprep.mubr.bf16.mxu0 0
        %296 = vmatmul.mubr.bf16.gmra.mrb[0].mxu0 %v221
        %v297 = vpop.f32.mrb[0].mxu0
        %v298 = vadd.f32 0.0, %v297
        %v299 = vpop.f32.mrb[0].mxu0
        %v300 = vpop.f32.mrb[0].mxu0
        %v301 = vadd.f32 0.0, %v300
        %v302 = vpop.f32.mrb[0].mxu0
        %303 = vdwg.mxu0
        %v304 = vpack.c.bf16 %v261, %v258
        %v305 = vpack.c.bf16 %v269, %v266
        %v306 = vpack.c.bf16 %v277, %v274
        %v307 = vpack.c.bf16 %v285, %v282
        %v308 = vpack.c.bf16 %v293, %v290
        %v309 = vpack.c.bf16 %v301, %v298
        %v316 = vunpack.c.l.b16 %v304
        %v317 = vunpack.c.h.b16 %v304
        %v318 = vunpack.c.l.b16 %v305
        %v319 = vunpack.c.h.b16 %v305
        %v320 = vunpack.c.l.b16 %v306
        %v321 = vunpack.c.h.b16 %v306
        %v322 = vunpack.c.l.b16 %v307
        %v323 = vunpack.c.h.b16 %v307
        %v324 = vunpack.c.l.b16 %v308
        %v325 = vunpack.c.h.b16 %v308
        %v326 = vunpack.c.l.b16 %v309
        %v327 = vunpack.c.h.b16 %v309
        %v328 = vpack.c.b16 %v316, %v316
        %v329 = vpack.c.b16 %v317, %v317
        %v330 = vpack.c.b16 %v318, %v318
        %v331 = vpack.c.b16 %v319, %v319
        %v332 = vpack.c.b16 %v320, %v320
        %v333 = vpack.c.b16 %v321, %v321
        %v334 = vpack.c.b16 %v322, %v322
        %v335 = vpack.c.b16 %v323, %v323
        %v336 = vpack.c.b16 %v324, %v324
        %v337 = vpack.c.b16 %v325, %v325
        %v338 = vpack.c.b16 %v326, %v326
        %v339 = vpack.c.b16 %v327, %v327
        %352 = vst [vmem:[%s137] sm:$0xf] %v328
        %353 = vst [vmem:[%s137 + $0x4] sm:$0xf] %v329
        %354 = vst [vmem:[%s137 + $0x8] sm:$0xf] %v330
        %355 = vst [vmem:[%s137 + $0xc] sm:$0xf] %v331
        %356 = vst [vmem:[%s137 + $0x10] sm:$0xf] %v332
        %357 = vst [vmem:[%s137 + $0x14] sm:$0xf] %v333
        %358 = vst [vmem:[%s137 + $0x18] sm:$0xf] %v334
        %359 = vst [vmem:[%s137 + $0x1c] sm:$0xf] %v335
        %360 = vst [vmem:[%s137 + $0x20] sm:$0xf] %v336
        %361 = vst [vmem:[%s137 + $0x24] sm:$0xf] %v337
        %362 = vst [vmem:[%s137 + $0x28] sm:$0xf] %v338
        %363 = vst [vmem:[%s137 + $0x2c] sm:$0xf] %v339
        %s364 = sand.u32 %s71, 1
        %s365 = scalar_lea.sflag [#allocation3], %s364
        %s366 = sand.u32 %s71, 1
        %s367 = smul.addr %s366, 48
        %s368 = scalar_lea.vmem [#allocation2], %s367
        // Predicated region
        $region29: #{tpu_custom_call.1} parent=27 // pred_check
          %p369 = pneg %p81
        $region30: #{tpu_custom_call.1} parent=27 // pred_check_branch
          %371 = sbr.rel (%p369) target = $region32
        $region31: #{tpu_custom_call.1} parent=27 // pred_region
          %s372 = smul.u32 12, %s16
          %s374 = ssub.s32 768, 768
          %375 = vsyncadd %s365, %s374
          %s376 = smul.addr %s372, 64
          %s377 = scalar_lea.hbm %s2, %s376
          %s378 = sshll.u32 %s368, 4
          %s379 = int_to_ptr.vmem [resolvable:$true] %s378
          %384 = dma.vmem_to_hbm [thread:$0]  %s379, 768, %s377, %s365, 64, 64, 4
        $region32: #{tpu_custom_call.1} parent=27 // pred_fallthru
          _
      $region28: #{tpu_custom_call.1} parent=5 // pred_fallthru
        _
      %p385 = scmp.le.s32.totalorder 2, %s11
      // Predicated region
      $region33: #{tpu_custom_call.1} parent=5 // pred_check
        %p386 = pneg %p385
      $region34: #{tpu_custom_call.1} parent=5 // pred_check_branch
        %388 = sbr.rel (%p386) target = $region36
      $region35: #{tpu_custom_call.1} parent=5 // pred_region
        %s389 = ssub.s32 %s11, 2
        // Predicated region
        $region37: #{tpu_custom_call.1} parent=35 // pred_check
          %p390 = pneg %p87
        $region38: #{tpu_custom_call.1} parent=35 // pred_check_branch
          %392 = sbr.rel (%p390) target = $region40
        $region39: #{tpu_custom_call.1} parent=35 // pred_region
          %s393 = sand.u32 %s72, 1
          %s394 = scalar_lea.sflag [#allocation3], %s393
          %s395 = sand.u32 %s72, 1
          %s396 = smul.addr %s395, 48
          %s397 = scalar_lea.vmem [#allocation2], %s396
          %398 = dma.done %s394, 768
        $region40: #{tpu_custom_call.1} parent=35 // pred_fallthru
          _
      $region36: #{tpu_custom_call.1} parent=5 // pred_fallthru
        _
    $region6: #{tpu_custom_call.1} parent=1 // loop_footer
      %s15 = sadd.s32 1, %s11
    $region7: #{tpu_custom_call.1} parent=1 // loop_footer_branch
      %10 = sbr.rel target = $region3
    $region8: #{tpu_custom_call.1} parent=1 // loop_exit
      _
    %399 = vsyncpa [#allocation3], 1
    %s400 = scalar_lea.sflag [#allocation3], 1
    %401 = vsyncpa %s400, 1

</llo_original>
